<compile_context>
chip_gen: v5e
topology: v5e:2x2
jax: 0.10.0
libtpu: 0.0.40
codegen_flags: <defaults>
</compile_context>

<pallas_src>
import jax
import jax.numpy as jnp
from jax.experimental import pallas as pl
from jax.experimental.pallas import tpu as pltpu

SIGMA_DATA = 0.5  # EDM sigma_data
SD2 = SIGMA_DATA * SIGMA_DATA


def _round_up(x, m):
    return ((x + m - 1) // m) * m


def _pick_block(n, row_bytes, sublane, target_block_bytes, min_grid=2):
    """Pick (B_BLK, num_blocks, n_pad).

    B_BLK is a multiple of `sublane` whose input block fits the byte budget and
    the grid always has >= min_grid steps (pipelining / v7x megacore). Exact
    divisors of n are preferred (no HBM padding copy); otherwise the tail is
    padded and padded rows are sliced off the result on the host side.
    """
    max_rows = max(sublane,
                   (target_block_bytes // max(row_bytes, 1)) // sublane * sublane)
    best = 0
    d = sublane
    while d <= min(n, max_rows):
        if n % d == 0 and n // d >= min_grid:
            best = d
        d += sublane
    if best:
        return best, n // best, n
    blk = max(sublane, min(max_rows, _round_up(-(-n // min_grid), sublane)))
    nb = max(min_grid, -(-n // blk))
    return blk, nb, nb * blk


def video_diffusion_l2_loss(x_nchw, noise_nchw, sigmas, net_w, net_b,
                            *, target_block_bytes=4 << 20):
    """StandardVideoDiffusionLoss ('l2') forward as a Pallas TPU kernel.

    x_nchw / noise_nchw: (N, C, H, W) latents + gaussian noise, shipped in their
        native dtype (bf16 recommended — the kernel is HBM-bound and casts to
        f32 internally). sigmas: (N,). net_w: (C, C). net_b: (C,).
    Returns per-sample l2 loss of shape (N,), f32.
    """
    N, C, H, W = x_nchw.shape
    HW = H * W
    ROW = C * HW
    inv_elems = 1.0 / float(ROW)

    # Free, contiguous reshapes only: no HBM transpose, no dtype upcast.
    x2 = x_nchw.reshape(N, ROW)
    n2 = noise_nchw.reshape(N, ROW)
    sig2 = sigmas.reshape(N, 1).astype(jnp.float32)
    w_flat = net_w.reshape(C * C).astype(jnp.float32)   # w[c, o] at index c*C + o
    b_vec = net_b.reshape(C).astype(jnp.float32)

    itemsize = x2.dtype.itemsize
    sublane = max(8, 32 // itemsize)                     # 8 f32 / 16 bf16 / 32 int8
    row_bytes = ROW * itemsize
    B_BLK, num_blocks, n_pad = _pick_block(N, row_bytes, sublane, target_block_bytes)

    if n_pad != N:
        pad = n_pad - N
        x2 = jnp.pad(x2, ((0, pad), (0, 0)))
        n2 = jnp.pad(n2, ((0, pad), (0, 0)))
        sig2 = jnp.pad(sig2, ((0, pad), (0, 0)), constant_values=1.0)  # no /0 in pad rows

    lane_pack = (B_BLK % 128 == 0)

    def kernel(w_sm, b_sm, x_ref, n_ref, sig_ref, out_ref):
        sig = sig_ref[...]                       # (B_BLK, 1) f32 per-block sigma tile
        s2 = sig * sig
        denom = s2 + SD2
        c_in = jax.lax.rsqrt(denom)              # EDM c_in
        c_skip = SD2 / denom                     # EDM c_skip
        c_out = sig * SIGMA_DATA * c_in          # EDM c_out
        w_norm = denom / (s2 * SD2) * inv_elems  # EDM weight * 1/(C*H*W)

        # Fold c_in into per-sample effective conv weights: C*C tiny (B_BLK, 1)
        # columns hoisted above the channel loop (no full-width xin temporary).
        w_eff = [[c_in * w_sm[c * C + o] for o in range(C)] for c in range(C)]

        # get_noised_input per channel slice — the single retained block-sized
        # f32 temporary; inputs stay bf16 in VMEM until cast here.
        noised = [
            x_ref[:, c * HW:(c + 1) * HW].astype(jnp.float32)
            + n_ref[:, c * HW:(c + 1) * HW].astype(jnp.float32) * sig
            for c in range(C)
        ]

        # Synthetic denoiser network: 1x1 conv (C->C) + bias + tanh, as C*C VPU
        # broadcast-FMAs on lane-aligned channel slices (no MXU for tiny C).
        sq = None
        for o in range(C):
            acc = noised[0] * w_eff[0][o]
            for c in range(1, C):
                acc = acc + noised[c] * w_eff[c][o]
            net = jnp.tanh(acc + b_sm[o])                          # EUP slot
            model_o = net * c_out + noised[o] * c_skip             # denoiser output
            d = model_o - x_ref[:, o * HW:(o + 1) * HW].astype(jnp.float32)
            sq = d * d if sq is None else sq + d * d

        # Per-sample mean over (C,H,W) with EDM weight folded in -> (B_BLK, 1).
        loss = jnp.sum(sq, axis=-1, keepdims=True) * w_norm
        if lane_pack:
            out_ref[0] = loss.reshape(B_BLK // 128, 128)           # lane-dense write
        else:
            out_ref[...] = loss                                    # tiny per-sample column

    if lane_pack:
        out_shape = jax.ShapeDtypeStruct((num_blocks, B_BLK // 128, 128), jnp.float32)
        out_spec = pl.BlockSpec((1, B_BLK // 128, 128), lambda i, *_: (i, 0, 0))
    else:
        out_shape = jax.ShapeDtypeStruct((n_pad, 1), jnp.float32)
        out_spec = pl.BlockSpec((B_BLK, 1), lambda i, *_: (i, 0))

    blk_in = B_BLK * ROW * itemsize
    # 2 inputs x 2 pipeline buffers (native dtype) + ~3 block-sized f32 live temps.
    vmem_need = 4 * blk_in + 3 * B_BLK * ROW * 4
    vmem_limit = int(min(96 << 20, max(32 << 20, vmem_need)))

    out = pl.pallas_call(
        kernel,
        out_shape=out_shape,
        grid_spec=pltpu.PrefetchScalarGridSpec(
            num_scalar_prefetch=2,                                 # conv weight + bias -> SMEM
            grid=(num_blocks,),
            in_specs=[
                pl.BlockSpec((B_BLK, ROW), lambda i, *_: (i, 0)),  # latents block (native dtype)
                pl.BlockSpec((B_BLK, ROW), lambda i, *_: (i, 0)),  # noise block (native dtype)
                pl.BlockSpec((B_BLK, 1), lambda i, *_: (i, 0)),    # per-block sigma column
            ],
            out_specs=out_spec,
        ),
        compiler_params=pltpu.CompilerParams(
            dimension_semantics=("parallel",),
            vmem_limit_bytes=vmem_limit,
        ),
    )(w_flat, b_vec, x2, n2, sig2)

    if lane_pack:
        return out.reshape(n_pad)[:N]
    return out[:N, 0]


def reference_loss(x_nchw, noise_nchw, sigmas, net_w, net_b):
    """Pure-JAX reference mirroring the PyTorch semantics (NCHW, l2)."""
    N, C, H, W = x_nchw.shape
    x = x_nchw.astype(jnp.float32)
    nz = noise_nchw.astype(jnp.float32)
    sig = sigmas.reshape(N, 1, 1, 1).astype(jnp.float32)          # append_dims(sigmas, ndim)
    noised = x + nz * sig
    s2 = sig * sig
    c_skip = SD2 / (s2 + SD2)
    c_out = sig * SIGMA_DATA / jnp.sqrt(s2 + SD2)
    c_in = 1.0 / jnp.sqrt(s2 + SD2)
    h = jnp.einsum('nchw,co->nohw', noised * c_in, net_w.astype(jnp.float32),
                   precision=jax.lax.Precision.HIGHEST) + net_b.astype(jnp.float32).reshape(1, C, 1, 1)
    model_output = jnp.tanh(h) * c_out + noised * c_skip
    w_loss = (s2 + SD2) / (s2 * SD2)                              # EDM weighting
    per_elem = w_loss * (model_output - x) ** 2
    return jnp.mean(per_elem.reshape(N, -1), axis=1)              # mean over dim 1


if __name__ == "__main__":
    # Small shapes consistent with the module's forward: input.shape[0] = batch * num_frames
    batch, num_frames = 2, 4
    N = batch * num_frames
    C, H, W = 4, 16, 16

    key = jax.random.PRNGKey(0)
    k_x, k_noise, k_sig, k_w = jax.random.split(key, 4)

    # Latents and noise shipped in bf16 (native training dtype; halves HBM reads).
    # NOTE: noise could instead be generated in-kernel (pltpu.prng_seed +
    # pltpu.stateful_normal) to drop another ~half of HBM reads, but the HBM
    # path is kept here for bit-exact parity against the jax.random reference.
    x_nchw = jax.random.normal(k_x, (N, C, H, W), dtype=jnp.float32).astype(jnp.bfloat16)
    noise_nchw = jax.random.normal(k_noise, (N, C, H, W), dtype=jnp.float32).astype(jnp.bfloat16)

    # sigma_sampler: EDM log-normal, one sigma per video, repeated over frames ('b -> (b t)')
    p_mean, p_std = -1.2, 1.2
    sig_per_video = jnp.exp(p_mean + p_std * jax.random.normal(k_sig, (batch,), dtype=jnp.float32))
    sigmas = jnp.repeat(sig_per_video, num_frames)

    # Deterministic synthetic network parameters (1x1 conv C->C + bias); offset_noise_level == 0.0
    net_w = (jax.random.normal(k_w, (C, C), dtype=jnp.float32) / jnp.sqrt(C)).astype(jnp.float32)
    net_b = jnp.linspace(-0.1, 0.1, C, dtype=jnp.float32)

    loss = jax.block_until_ready(video_diffusion_l2_loss(x_nchw, noise_nchw, sigmas, net_w, net_b))
    ref = jax.block_until_ready(reference_loss(x_nchw, noise_nchw, sigmas, net_w, net_b))

    assert loss.shape == (N,)
    assert jnp.allclose(loss, ref, rtol=1e-3, atol=1e-3), (loss, ref)

    # TODO(synk): the conditioner and a real UNet denoiser network, plus the
    # 'l1' / 'lpips' loss branches, are external modules with no in-kernel
    # equivalent; a synthetic 1x1-conv network and the 'l2' branch are used.
    print("KERNEL_OK")
</pallas_src>

<mosaic_0001>
module attributes {stable_mosaic.version = 11 : i64} {
  func.func @kernel(%arg0: i32, %arg1: memref<16xf32, #tpu.memory_space<smem>>, %arg2: memref<4xf32, #tpu.memory_space<smem>>, %arg3: memref<16x1024xbf16, #tpu.memory_space<vmem>>, %arg4: memref<16x1024xbf16, #tpu.memory_space<vmem>>, %arg5: memref<16x1xf32, #tpu.memory_space<vmem>>, %arg6: memref<16x1xf32, #tpu.memory_space<vmem>>) attributes {dimension_semantics = [#tpu.dimension_semantics<parallel>], iteration_bounds = array<i64: 2>, scalar_prefetch = 2 : i64, scratch_operands = 0 : i64, tpu.core_type = #tpu.core_type<tc>, window_params = [{transform_indices = @transform_0, window_bounds = array<i64: 16, 1024>}, {transform_indices = @transform_1, window_bounds = array<i64: 16, 1024>}, {transform_indices = @transform_2, window_bounds = array<i64: 16, 1>}, {transform_indices = @transform_3, window_bounds = array<i64: 16, 1>}]} {
    %c0 = arith.constant 0 : index
    %c0_0 = arith.constant 0 : index
    %0 = vector.load %arg5[%c0, %c0_0] : memref<16x1xf32, #tpu.memory_space<vmem>>, vector<16x1xf32>
    %1 = arith.mulf %0, %0 : vector<16x1xf32>
    %cst = arith.constant 2.500000e-01 : f32
    %2 = vector.broadcast %cst : f32 to vector<16x1xf32>
    %3 = arith.addf %1, %2 : vector<16x1xf32>
    %4 = math.rsqrt %3 : vector<16x1xf32>
    %cst_1 = arith.constant 2.500000e-01 : f32
    %5 = vector.broadcast %cst_1 : f32 to vector<16x1xf32>
    %6 = arith.divf %5, %3 : vector<16x1xf32>
    %cst_2 = arith.constant 5.000000e-01 : f32
    %7 = vector.broadcast %cst_2 : f32 to vector<16x1xf32>
    %8 = arith.mulf %0, %7 : vector<16x1xf32>
    %9 = arith.mulf %8, %4 : vector<16x1xf32>
    %cst_3 = arith.constant 2.500000e-01 : f32
    %10 = vector.broadcast %cst_3 : f32 to vector<16x1xf32>
    %11 = arith.mulf %1, %10 : vector<16x1xf32>
    %12 = arith.divf %3, %11 : vector<16x1xf32>
    %cst_4 = arith.constant 9.765625E-4 : f32
    %13 = vector.broadcast %cst_4 : f32 to vector<16x1xf32>
    %14 = arith.mulf %12, %13 : vector<16x1xf32>
    %c0_5 = arith.constant 0 : index
    %15 = memref.load %arg1[%c0_5] : memref<16xf32, #tpu.memory_space<smem>>
    %16 = vector.broadcast %15 : f32 to vector<16x1xf32>
    %17 = arith.mulf %4, %16 : vector<16x1xf32>
    %c1 = arith.constant 1 : index
    %18 = memref.load %arg1[%c1] : memref<16xf32, #tpu.memory_space<smem>>
    %19 = vector.broadcast %18 : f32 to vector<16x1xf32>
    %20 = arith.mulf %4, %19 : vector<16x1xf32>
    %c2 = arith.constant 2 : index
    %21 = memref.load %arg1[%c2] : memref<16xf32, #tpu.memory_space<smem>>
    %22 = vector.broadcast %21 : f32 to vector<16x1xf32>
    %23 = arith.mulf %4, %22 : vector<16x1xf32>
    %c3 = arith.constant 3 : index
    %24 = memref.load %arg1[%c3] : memref<16xf32, #tpu.memory_space<smem>>
    %25 = vector.broadcast %24 : f32 to vector<16x1xf32>
    %26 = arith.mulf %4, %25 : vector<16x1xf32>
    %c4 = arith.constant 4 : index
    %27 = memref.load %arg1[%c4] : memref<16xf32, #tpu.memory_space<smem>>
    %28 = vector.broadcast %27 : f32 to vector<16x1xf32>
    %29 = arith.mulf %4, %28 : vector<16x1xf32>
    %c5 = arith.constant 5 : index
    %30 = memref.load %arg1[%c5] : memref<16xf32, #tpu.memory_space<smem>>
    %31 = vector.broadcast %30 : f32 to vector<16x1xf32>
    %32 = arith.mulf %4, %31 : vector<16x1xf32>
    %c6 = arith.constant 6 : index
    %33 = memref.load %arg1[%c6] : memref<16xf32, #tpu.memory_space<smem>>
    %34 = vector.broadcast %33 : f32 to vector<16x1xf32>
    %35 = arith.mulf %4, %34 : vector<16x1xf32>
    %c7 = arith.constant 7 : index
    %36 = memref.load %arg1[%c7] : memref<16xf32, #tpu.memory_space<smem>>
    %37 = vector.broadcast %36 : f32 to vector<16x1xf32>
    %38 = arith.mulf %4, %37 : vector<16x1xf32>
    %c8 = arith.constant 8 : index
    %39 = memref.load %arg1[%c8] : memref<16xf32, #tpu.memory_space<smem>>
    %40 = vector.broadcast %39 : f32 to vector<16x1xf32>
    %41 = arith.mulf %4, %40 : vector<16x1xf32>
    %c9 = arith.constant 9 : index
    %42 = memref.load %arg1[%c9] : memref<16xf32, #tpu.memory_space<smem>>
    %43 = vector.broadcast %42 : f32 to vector<16x1xf32>
    %44 = arith.mulf %4, %43 : vector<16x1xf32>
    %c10 = arith.constant 10 : index
    %45 = memref.load %arg1[%c10] : memref<16xf32, #tpu.memory_space<smem>>
    %46 = vector.broadcast %45 : f32 to vector<16x1xf32>
    %47 = arith.mulf %4, %46 : vector<16x1xf32>
    %c11 = arith.constant 11 : index
    %48 = memref.load %arg1[%c11] : memref<16xf32, #tpu.memory_space<smem>>
    %49 = vector.broadcast %48 : f32 to vector<16x1xf32>
    %50 = arith.mulf %4, %49 : vector<16x1xf32>
    %c12 = arith.constant 12 : index
    %51 = memref.load %arg1[%c12] : memref<16xf32, #tpu.memory_space<smem>>
    %52 = vector.broadcast %51 : f32 to vector<16x1xf32>
    %53 = arith.mulf %4, %52 : vector<16x1xf32>
    %c13 = arith.constant 13 : index
    %54 = memref.load %arg1[%c13] : memref<16xf32, #tpu.memory_space<smem>>
    %55 = vector.broadcast %54 : f32 to vector<16x1xf32>
    %56 = arith.mulf %4, %55 : vector<16x1xf32>
    %c14 = arith.constant 14 : index
    %57 = memref.load %arg1[%c14] : memref<16xf32, #tpu.memory_space<smem>>
    %58 = vector.broadcast %57 : f32 to vector<16x1xf32>
    %59 = arith.mulf %4, %58 : vector<16x1xf32>
    %c15 = arith.constant 15 : index
    %60 = memref.load %arg1[%c15] : memref<16xf32, #tpu.memory_space<smem>>
    %61 = vector.broadcast %60 : f32 to vector<16x1xf32>
    %62 = arith.mulf %4, %61 : vector<16x1xf32>
    %c0_6 = arith.constant 0 : index
    %c0_7 = arith.constant 0 : index
    %63 = vector.load %arg3[%c0_6, %c0_7] : memref<16x1024xbf16, #tpu.memory_space<vmem>>, vector<16x256xbf16>
    %64 = arith.extf %63 : vector<16x256xbf16> to vector<16x256xf32>
    %c0_8 = arith.constant 0 : index
    %c0_9 = arith.constant 0 : index
    %65 = vector.load %arg4[%c0_8, %c0_9] : memref<16x1024xbf16, #tpu.memory_space<vmem>>, vector<16x256xbf16>
    %66 = arith.extf %65 : vector<16x256xbf16> to vector<16x256xf32>
    %67 = vector.broadcast %0 : vector<16x1xf32> to vector<16x256xf32>
    %68 = arith.mulf %66, %67 : vector<16x256xf32>
    %69 = arith.addf %64, %68 : vector<16x256xf32>
    %c0_10 = arith.constant 0 : index
    %c256 = arith.constant 256 : index
    %70 = vector.load %arg3[%c0_10, %c256] : memref<16x1024xbf16, #tpu.memory_space<vmem>>, vector<16x256xbf16>
    %71 = arith.extf %70 : vector<16x256xbf16> to vector<16x256xf32>
    %c0_11 = arith.constant 0 : index
    %c256_12 = arith.constant 256 : index
    %72 = vector.load %arg4[%c0_11, %c256_12] : memref<16x1024xbf16, #tpu.memory_space<vmem>>, vector<16x256xbf16>
    %73 = arith.extf %72 : vector<16x256xbf16> to vector<16x256xf32>
    %74 = vector.broadcast %0 : vector<16x1xf32> to vector<16x256xf32>
    %75 = arith.mulf %73, %74 : vector<16x256xf32>
    %76 = arith.addf %71, %75 : vector<16x256xf32>
    %c0_13 = arith.constant 0 : index
    %c512 = arith.constant 512 : index
    %77 = vector.load %arg3[%c0_13, %c512] : memref<16x1024xbf16, #tpu.memory_space<vmem>>, vector<16x256xbf16>
    %78 = arith.extf %77 : vector<16x256xbf16> to vector<16x256xf32>
    %c0_14 = arith.constant 0 : index
    %c512_15 = arith.constant 512 : index
    %79 = vector.load %arg4[%c0_14, %c512_15] : memref<16x1024xbf16, #tpu.memory_space<vmem>>, vector<16x256xbf16>
    %80 = arith.extf %79 : vector<16x256xbf16> to vector<16x256xf32>
    %81 = vector.broadcast %0 : vector<16x1xf32> to vector<16x256xf32>
    %82 = arith.mulf %80, %81 : vector<16x256xf32>
    %83 = arith.addf %78, %82 : vector<16x256xf32>
    %c0_16 = arith.constant 0 : index
    %c768 = arith.constant 768 : index
    %84 = vector.load %arg3[%c0_16, %c768] : memref<16x1024xbf16, #tpu.memory_space<vmem>>, vector<16x256xbf16>
    %85 = arith.extf %84 : vector<16x256xbf16> to vector<16x256xf32>
    %c0_17 = arith.constant 0 : index
    %c768_18 = arith.constant 768 : index
    %86 = vector.load %arg4[%c0_17, %c768_18] : memref<16x1024xbf16, #tpu.memory_space<vmem>>, vector<16x256xbf16>
    %87 = arith.extf %86 : vector<16x256xbf16> to vector<16x256xf32>
    %88 = vector.broadcast %0 : vector<16x1xf32> to vector<16x256xf32>
    %89 = arith.mulf %87, %88 : vector<16x256xf32>
    %90 = arith.addf %85, %89 : vector<16x256xf32>
    %91 = vector.broadcast %17 : vector<16x1xf32> to vector<16x256xf32>
    %92 = arith.mulf %69, %91 : vector<16x256xf32>
    %93 = vector.broadcast %29 : vector<16x1xf32> to vector<16x256xf32>
    %94 = arith.mulf %76, %93 : vector<16x256xf32>
    %95 = arith.addf %92, %94 : vector<16x256xf32>
    %96 = vector.broadcast %41 : vector<16x1xf32> to vector<16x256xf32>
    %97 = arith.mulf %83, %96 : vector<16x256xf32>
    %98 = arith.addf %95, %97 : vector<16x256xf32>
    %99 = vector.broadcast %53 : vector<16x1xf32> to vector<16x256xf32>
    %100 = arith.mulf %90, %99 : vector<16x256xf32>
    %101 = arith.addf %98, %100 : vector<16x256xf32>
    %c0_19 = arith.constant 0 : index
    %102 = memref.load %arg2[%c0_19] : memref<4xf32, #tpu.memory_space<smem>>
    %103 = vector.broadcast %102 : f32 to vector<16x256xf32>
    %104 = arith.addf %101, %103 : vector<16x256xf32>
    %105 = math.tanh %104 : vector<16x256xf32>
    %106 = vector.broadcast %9 : vector<16x1xf32> to vector<16x256xf32>
    %107 = arith.mulf %105, %106 : vector<16x256xf32>
    %108 = vector.broadcast %6 : vector<16x1xf32> to vector<16x256xf32>
    %109 = arith.mulf %69, %108 : vector<16x256xf32>
    %110 = arith.addf %107, %109 : vector<16x256xf32>
    %c0_20 = arith.constant 0 : index
    %c0_21 = arith.constant 0 : index
    %111 = vector.load %arg3[%c0_20, %c0_21] : memref<16x1024xbf16, #tpu.memory_space<vmem>>, vector<16x256xbf16>
    %112 = arith.extf %111 : vector<16x256xbf16> to vector<16x256xf32>
    %113 = arith.subf %110, %112 : vector<16x256xf32>
    %114 = arith.mulf %113, %113 : vector<16x256xf32>
    %115 = vector.broadcast %20 : vector<16x1xf32> to vector<16x256xf32>
    %116 = arith.mulf %69, %115 : vector<16x256xf32>
    %117 = vector.broadcast %32 : vector<16x1xf32> to vector<16x256xf32>
    %118 = arith.mulf %76, %117 : vector<16x256xf32>
    %119 = arith.addf %116, %118 : vector<16x256xf32>
    %120 = vector.broadcast %44 : vector<16x1xf32> to vector<16x256xf32>
    %121 = arith.mulf %83, %120 : vector<16x256xf32>
    %122 = arith.addf %119, %121 : vector<16x256xf32>
    %123 = vector.broadcast %56 : vector<16x1xf32> to vector<16x256xf32>
    %124 = arith.mulf %90, %123 : vector<16x256xf32>
    %125 = arith.addf %122, %124 : vector<16x256xf32>
    %c1_22 = arith.constant 1 : index
    %126 = memref.load %arg2[%c1_22] : memref<4xf32, #tpu.memory_space<smem>>
    %127 = vector.broadcast %126 : f32 to vector<16x256xf32>
    %128 = arith.addf %125, %127 : vector<16x256xf32>
    %129 = math.tanh %128 : vector<16x256xf32>
    %130 = vector.broadcast %9 : vector<16x1xf32> to vector<16x256xf32>
    %131 = arith.mulf %129, %130 : vector<16x256xf32>
    %132 = vector.broadcast %6 : vector<16x1xf32> to vector<16x256xf32>
    %133 = arith.mulf %76, %132 : vector<16x256xf32>
    %134 = arith.addf %131, %133 : vector<16x256xf32>
    %c0_23 = arith.constant 0 : index
    %c256_24 = arith.constant 256 : index
    %135 = vector.load %arg3[%c0_23, %c256_24] : memref<16x1024xbf16, #tpu.memory_space<vmem>>, vector<16x256xbf16>
    %136 = arith.extf %135 : vector<16x256xbf16> to vector<16x256xf32>
    %137 = arith.subf %134, %136 : vector<16x256xf32>
    %138 = arith.mulf %137, %137 : vector<16x256xf32>
    %139 = arith.addf %114, %138 : vector<16x256xf32>
    %140 = vector.broadcast %23 : vector<16x1xf32> to vector<16x256xf32>
    %141 = arith.mulf %69, %140 : vector<16x256xf32>
    %142 = vector.broadcast %35 : vector<16x1xf32> to vector<16x256xf32>
    %143 = arith.mulf %76, %142 : vector<16x256xf32>
    %144 = arith.addf %141, %143 : vector<16x256xf32>
    %145 = vector.broadcast %47 : vector<16x1xf32> to vector<16x256xf32>
    %146 = arith.mulf %83, %145 : vector<16x256xf32>
    %147 = arith.addf %144, %146 : vector<16x256xf32>
    %148 = vector.broadcast %59 : vector<16x1xf32> to vector<16x256xf32>
    %149 = arith.mulf %90, %148 : vector<16x256xf32>
    %150 = arith.addf %147, %149 : vector<16x256xf32>
    %c2_25 = arith.constant 2 : index
    %151 = memref.load %arg2[%c2_25] : memref<4xf32, #tpu.memory_space<smem>>
    %152 = vector.broadcast %151 : f32 to vector<16x256xf32>
    %153 = arith.addf %150, %152 : vector<16x256xf32>
    %154 = math.tanh %153 : vector<16x256xf32>
    %155 = vector.broadcast %9 : vector<16x1xf32> to vector<16x256xf32>
    %156 = arith.mulf %154, %155 : vector<16x256xf32>
    %157 = vector.broadcast %6 : vector<16x1xf32> to vector<16x256xf32>
    %158 = arith.mulf %83, %157 : vector<16x256xf32>
    %159 = arith.addf %156, %158 : vector<16x256xf32>
    %c0_26 = arith.constant 0 : index
    %c512_27 = arith.constant 512 : index
    %160 = vector.load %arg3[%c0_26, %c512_27] : memref<16x1024xbf16, #tpu.memory_space<vmem>>, vector<16x256xbf16>
    %161 = arith.extf %160 : vector<16x256xbf16> to vector<16x256xf32>
    %162 = arith.subf %159, %161 : vector<16x256xf32>
    %163 = arith.mulf %162, %162 : vector<16x256xf32>
    %164 = arith.addf %139, %163 : vector<16x256xf32>
    %165 = vector.broadcast %26 : vector<16x1xf32> to vector<16x256xf32>
    %166 = arith.mulf %69, %165 : vector<16x256xf32>
    %167 = vector.broadcast %38 : vector<16x1xf32> to vector<16x256xf32>
    %168 = arith.mulf %76, %167 : vector<16x256xf32>
    %169 = arith.addf %166, %168 : vector<16x256xf32>
    %170 = vector.broadcast %50 : vector<16x1xf32> to vector<16x256xf32>
    %171 = arith.mulf %83, %170 : vector<16x256xf32>
    %172 = arith.addf %169, %171 : vector<16x256xf32>
    %173 = vector.broadcast %62 : vector<16x1xf32> to vector<16x256xf32>
    %174 = arith.mulf %90, %173 : vector<16x256xf32>
    %175 = arith.addf %172, %174 : vector<16x256xf32>
    %c3_28 = arith.constant 3 : index
    %176 = memref.load %arg2[%c3_28] : memref<4xf32, #tpu.memory_space<smem>>
    %177 = vector.broadcast %176 : f32 to vector<16x256xf32>
    %178 = arith.addf %175, %177 : vector<16x256xf32>
    %179 = math.tanh %178 : vector<16x256xf32>
    %180 = vector.broadcast %9 : vector<16x1xf32> to vector<16x256xf32>
    %181 = arith.mulf %179, %180 : vector<16x256xf32>
    %182 = vector.broadcast %6 : vector<16x1xf32> to vector<16x256xf32>
    %183 = arith.mulf %90, %182 : vector<16x256xf32>
    %184 = arith.addf %181, %183 : vector<16x256xf32>
    %c0_29 = arith.constant 0 : index
    %c768_30 = arith.constant 768 : index
    %185 = vector.load %arg3[%c0_29, %c768_30] : memref<16x1024xbf16, #tpu.memory_space<vmem>>, vector<16x256xbf16>
    %186 = arith.extf %185 : vector<16x256xbf16> to vector<16x256xf32>
    %187 = arith.subf %184, %186 : vector<16x256xf32>
    %188 = arith.mulf %187, %187 : vector<16x256xf32>
    %189 = arith.addf %164, %188 : vector<16x256xf32>
    %cst_31 = arith.constant dense<0.000000e+00> : vector<16xf32>
    %190 = vector.multi_reduction <add>, %189, %cst_31 [1] : vector<16x256xf32> to vector<16xf32>
    %191 = vector.shape_cast %190 : vector<16xf32> to vector<16x1xf32>
    %192 = arith.mulf %191, %14 : vector<16x1xf32>
    %c0_32 = arith.constant 0 : index
    %c0_33 = arith.constant 0 : index
    %193 = vector.load %arg6[%c0_32, %c0_33] : memref<16x1xf32, #tpu.memory_space<vmem>>, vector<16x1xf32>
    tpu.vector_store %arg6[%c0_32, %c0_33], %192 {strides = array<i32>} : memref<16x1xf32, #tpu.memory_space<vmem>>, vector<16x1xf32>,
    return
  }
  func.func @transform_0(%arg0: i32, %arg1: memref<16xf32, #tpu.memory_space<smem>>, %arg2: memref<4xf32, #tpu.memory_space<smem>>) -> (i32, i32) {
    %c0_i32 = arith.constant 0 : i32
    %c0_i32_0 = arith.constant 0 : i32
    return %arg0, %c0_i32 : i32, i32
  }
  func.func @transform_1(%arg0: i32, %arg1: memref<16xf32, #tpu.memory_space<smem>>, %arg2: memref<4xf32, #tpu.memory_space<smem>>) -> (i32, i32) {
    %c0_i32 = arith.constant 0 : i32
    %c0_i32_0 = arith.constant 0 : i32
    return %arg0, %c0_i32 : i32, i32
  }
  func.func @transform_2(%arg0: i32, %arg1: memref<16xf32, #tpu.memory_space<smem>>, %arg2: memref<4xf32, #tpu.memory_space<smem>>) -> (i32, i32) {
    %c0_i32 = arith.constant 0 : i32
    %c0_i32_0 = arith.constant 0 : i32
    return %arg0, %c0_i32 : i32, i32
  }
  func.func @transform_3(%arg0: i32, %arg1: memref<16xf32, #tpu.memory_space<smem>>, %arg2: memref<4xf32, #tpu.memory_space<smem>>) -> (i32, i32) {
    %c0_i32 = arith.constant 0 : i32
    %c0_i32_0 = arith.constant 0 : i32
    return %arg0, %c0_i32 : i32, i32
  }
}

</mosaic_0001>

<llo_original>
// kernel: tpu_custom_call.1
$region0: #{tpu_custom_call.1}
  #allocation0 [shape = 'u32[]', space=smem, size = 0x4, offset = 0x4, fixed_abs, tag = 'smem constant byte address 0x4 - core index']
  #allocation1 [shape = 'u32[72,128]{1,0:T(1,128)}', space=vmem, size = 0x9000, scoped, tag = 'internal scratch']
  #allocation2 [shape = 's32[1]{0}', space=sflag, size = 0x4, scoped, tag = 'scoped memory for tpu_custom_call.1']
  #allocation3 [shape = 'u8[512]{0}', space=smem, size = 0x200, scoped, tag = 'prefetched SMEM operand 0']
  #allocation4 [shape = 'u8[512]{0}', space=smem, size = 0x200, scoped, tag = 'prefetched SMEM operand 1']
  %s0 = inlined_call_operand.vmem [shape: f32[16], index: 0, kind: input, shape index: {}]
  %s1 = inlined_call_operand.vmem [shape: f32[4], index: 1, kind: input, shape index: {}]
  %s2 = inlined_call_operand.hbm [shape: bf16[32,1024], index: 2, kind: input, shape index: {}]
  %s3 = inlined_call_operand.hbm [shape: bf16[32,1024], index: 3, kind: input, shape index: {}]
  %s4 = inlined_call_operand.vmem [shape: f32[32,1], index: 4, kind: input, shape index: {}]
  %s5 = inlined_call_operand.vmem [shape: f32[32,1], index: 5, kind: output, shape index: {}]
  %s6 = sld [smem:[#allocation0]]
  $region53: #{tpu_custom_call.1} parent=0
    _
  %s8 = ssub.s32 1, %s6
  %s9 = scalar_select 0, %s8, %s6
  %s11 = sshll.u32 %s0, 4
  %s12 = int_to_ptr.vmem [resolvable:$true] %s11
  %14 = dma.vmem_to_smem %s12, 16, [#allocation3], [#allocation2]
  %s16 = sshll.u32 %s1, 4
  %s17 = int_to_ptr.vmem [resolvable:$true] %s16
  %19 = dma.vmem_to_smem %s17, 16, [#allocation4], [#allocation2]
  %21 = dma.done [#allocation2], 32
  %22 = sfence
  $region1: #{tpu_custom_call.1} parent=0
    #allocation5 [shape = 'u8[65536]{0}', space=vmem, size = 0x10000, scoped, tag = 'input window, operand 2']
    #allocation6 [shape = 's32[2]{0}', space=sflag, size = 0x8, scoped, tag = 'scoped memory for tpu_custom_call.1']
    #allocation7 [shape = 'u8[65536]{0}', space=vmem, size = 0x10000, scoped, tag = 'input window, operand 3']
    #allocation8 [shape = 's32[2]{0}', space=sflag, size = 0x8, scoped, tag = 'scoped memory for tpu_custom_call.1']
    %23 = vsyncpa [#allocation6], 0
    %s24 = scalar_lea.sflag [#allocation6], 1
    %25 = vsyncpa %s24, 0
    %26 = vsyncpa [#allocation8], 0
    %s27 = scalar_lea.sflag [#allocation8], 1
    %28 = vsyncpa %s27, 0
    loop: start=0, step=1, limit=4
    $region2: #{tpu_custom_call.1} parent=1 // loop_pre_header
      _
    $region3: #{tpu_custom_call.1} parent=1 // loop_header
      %s30 = sphi 0, %s34
      %p31 = scmp.ge.s32.totalorder %s30, 4
      %s40 = sphi 0, %s42
      %s43 = sphi 0, %s40
      %s44 = sphi 0, %s43
      %s60 = sphi 0, %s44
      %s66 = sphi 0, %s68
      %s69 = sphi 0, %s66
      %s70 = sphi 0, %s69
      %s86 = sphi 0, %s70
      %s92 = sphi 0, %s94
      %s95 = sphi 0, %s92
      %s96 = sphi 0, %s95
      %s112 = sphi 0, %s96
      %s118 = sphi 0, %s120
      %s121 = sphi 0, %s118
      %s122 = sphi 0, %s121
      %s138 = sphi 0, %s122
    $region4: #{tpu_custom_call.1} parent=1 // loop_header_branch
      %33 = sbr.rel (%p31) target = $region8
    $region5: #{tpu_custom_call.1} parent=1 // loop_body
      %s35 = ssub.s32 %s30, 1
      %s36 = ssub.s32 %s30, 2
      %s37 = sadd.s32 %s30, 1
      %s38 = ssub.s32 %s30, %s37
      %p39 = scmp.eq.s32.totalorder %s38, 0
      %s41 = sadd.s32 %s40, 1
      %s42 = scalar_select %p39, %s40, %s41
      %p45 = pneg %p39
      %p46 = scmp.eq.s32.totalorder %s30, 1
      %p47 = por %p45, %p46
      %p48 = scmp.ne.s32.totalorder %s40, %s43
      %p49 = scmp.eq.s32.totalorder %s30, 0
      %p50 = por %p48, %p49
      %p51 = scmp.ne.s32.totalorder %s40, %s43
      %p52 = scmp.eq.s32.totalorder %s35, 1
      %p53 = por %p51, %p52
      %p54 = scmp.ne.s32.totalorder %s43, %s44
      %p55 = scmp.eq.s32.totalorder %s35, 0
      %p56 = por %p54, %p55
      %p57 = scmp.ne.s32.totalorder %s43, %s44
      %p58 = scmp.eq.s32.totalorder %s36, 1
      %p59 = por %p57, %p58
      %p61 = scmp.ne.s32.totalorder %s44, %s60
      %p62 = scmp.eq.s32.totalorder %s36, 0
      %p63 = por %p61, %p62
      %s64 = ssub.s32 %s30, %s37
      %p65 = scmp.eq.s32.totalorder %s64, 0
      %s67 = sadd.s32 %s66, 1
      %s68 = scalar_select %p65, %s66, %s67
      %p71 = pneg %p65
      %p72 = scmp.eq.s32.totalorder %s30, 1
      %p73 = por %p71, %p72
      %p74 = scmp.ne.s32.totalorder %s66, %s69
      %p75 = scmp.eq.s32.totalorder %s30, 0
      %p76 = por %p74, %p75
      %p77 = scmp.ne.s32.totalorder %s66, %s69
      %p78 = scmp.eq.s32.totalorder %s35, 1
      %p79 = por %p77, %p78
      %p80 = scmp.ne.s32.totalorder %s69, %s70
      %p81 = scmp.eq.s32.totalorder %s35, 0
      %p82 = por %p80, %p81
      %p83 = scmp.ne.s32.totalorder %s69, %s70
      %p84 = scmp.eq.s32.totalorder %s36, 1
      %p85 = por %p83, %p84
      %p87 = scmp.ne.s32.totalorder %s70, %s86
      %p88 = scmp.eq.s32.totalorder %s36, 0
      %p89 = por %p87, %p88
      %s90 = ssub.s32 %s30, %s37
      %p91 = scmp.eq.s32.totalorder %s90, 0
      %s93 = sadd.s32 %s92, 1
      %s94 = scalar_select %p91, %s92, %s93
      %p97 = pneg %p91
      %p98 = scmp.eq.s32.totalorder %s30, 1
      %p99 = por %p97, %p98
      %p100 = scmp.ne.s32.totalorder %s92, %s95
      %p101 = scmp.eq.s32.totalorder %s30, 0
      %p102 = por %p100, %p101
      %p103 = scmp.ne.s32.totalorder %s92, %s95
      %p104 = scmp.eq.s32.totalorder %s35, 1
      %p105 = por %p103, %p104
      %p106 = scmp.ne.s32.totalorder %s95, %s96
      %p107 = scmp.eq.s32.totalorder %s35, 0
      %p108 = por %p106, %p107
      %p109 = scmp.ne.s32.totalorder %s95, %s96
      %p110 = scmp.eq.s32.totalorder %s36, 1
      %p111 = por %p109, %p110
      %p113 = scmp.ne.s32.totalorder %s96, %s112
      %p114 = scmp.eq.s32.totalorder %s36, 0
      %p115 = por %p113, %p114
      %s116 = ssub.s32 %s30, %s37
      %p117 = scmp.eq.s32.totalorder %s116, 0
      %s119 = sadd.s32 %s118, 1
      %s120 = scalar_select %p117, %s118, %s119
      %p123 = pneg %p117
      %p124 = scmp.eq.s32.totalorder %s30, 1
      %p125 = por %p123, %p124
      %p126 = scmp.ne.s32.totalorder %s118, %s121
      %p127 = scmp.eq.s32.totalorder %s30, 0
      %p128 = por %p126, %p127
      %p129 = scmp.ne.s32.totalorder %s118, %s121
      %p130 = scmp.eq.s32.totalorder %s35, 1
      %p131 = por %p129, %p130
      %p132 = scmp.ne.s32.totalorder %s121, %s122
      %p133 = scmp.eq.s32.totalorder %s35, 0
      %p134 = por %p132, %p133
      %p135 = scmp.ne.s32.totalorder %s121, %s122
      %p136 = scmp.eq.s32.totalorder %s36, 1
      %p137 = por %p135, %p136
      %p139 = scmp.ne.s32.totalorder %s122, %s138
      %p140 = scmp.eq.s32.totalorder %s36, 0
      %p141 = por %p139, %p140
      %p142 = scmp.le.s32.totalorder 1, %s30
      %p143 = scmp.lt.s32.totalorder %s30, 3
      %p144 = pnand %p142, %p143
      %p145 = pneg %p144
      // Predicated region
      $region9: #{tpu_custom_call.1} parent=5 // pred_check
        _
      $region10: #{tpu_custom_call.1} parent=5 // pred_check_branch
        %147 = sbr.rel (%p144) target = $region12
      $region11: #{tpu_custom_call.1} parent=5 // pred_region
        %s148 = ssub.s32 %s30, 1
      $region12: #{tpu_custom_call.1} parent=5 // pred_fallthru
        _
      %p149 = scmp.lt.s32.totalorder %s30, 2
      // Predicated region
      $region13: #{tpu_custom_call.1} parent=5 // pred_check
        %p150 = pneg %p149
      $region14: #{tpu_custom_call.1} parent=5 // pred_check_branch
        %152 = sbr.rel (%p150) target = $region16
      $region15: #{tpu_custom_call.1} parent=5 // pred_region
        // Predicated region
        $region17: #{tpu_custom_call.1} parent=15 // pred_check
          %p153 = pneg %p50
        $region18: #{tpu_custom_call.1} parent=15 // pred_check_branch
          %155 = sbr.rel (%p153) target = $region20
        $region19: #{tpu_custom_call.1} parent=15 // pred_region
          %s156 = sand.u32 %s40, 1
          %s157 = scalar_lea.sflag [#allocation6], %s156
          %s158 = sand.u32 %s40, 1
          %s159 = smul.addr %s158, 64
          %s160 = scalar_lea.vmem [#allocation5], %s159
          %s161 = smul.u32 2, %s30
          %163 = vsyncadd %s157, 0
          %s164 = smul.addr %s161, 8
          %s165 = smul.addr %s164, 4
          %s166 = scalar_lea.hbm %s2, %s165
          %s167 = sshll.u32 %s166, 4
          %s168 = int_to_ptr.hbm [resolvable:$true] %s167
          %s169 = sshll.u32 %s160, 4
          %s170 = int_to_ptr.vmem [resolvable:$true] %s169
          %175 = dma.hbm_to_vmem [thread:$0]  %s168, 1024, %s170, %s157, 512, 512, 32
        $region20: #{tpu_custom_call.1} parent=15 // pred_fallthru
          _
        // Predicated region
        $region21: #{tpu_custom_call.1} parent=15 // pred_check
          %p176 = pneg %p76
        $region22: #{tpu_custom_call.1} parent=15 // pred_check_branch
          %178 = sbr.rel (%p176) target = $region24
        $region23: #{tpu_custom_call.1} parent=15 // pred_region
          %s179 = sand.u32 %s66, 1
          %s180 = scalar_lea.sflag [#allocation8], %s179
          %s181 = sand.u32 %s66, 1
          %s182 = smul.addr %s181, 64
          %s183 = scalar_lea.vmem [#allocation7], %s182
          %s184 = smul.u32 2, %s30
          %186 = vsyncadd %s180, 0
          %s187 = smul.addr %s184, 8
          %s188 = smul.addr %s187, 4
          %s189 = scalar_lea.hbm %s3, %s188
          %s190 = sshll.u32 %s189, 4
          %s191 = int_to_ptr.hbm [resolvable:$true] %s190
          %s192 = sshll.u32 %s183, 4
          %s193 = int_to_ptr.vmem [resolvable:$true] %s192
          %198 = dma.hbm_to_vmem [thread:$0]  %s191, 1024, %s193, %s180, 512, 512, 32
        $region24: #{tpu_custom_call.1} parent=15 // pred_fallthru
          _
        // Predicated region
        $region25: #{tpu_custom_call.1} parent=15 // pred_check
          %p199 = pneg %p102
        $region26: #{tpu_custom_call.1} parent=15 // pred_check_branch
          %201 = sbr.rel (%p199) target = $region28
        $region27: #{tpu_custom_call.1} parent=15 // pred_region
          %s202 = smul.u32 2, %s30
          %p203 = scmp.lt.s32.totalorder %s202, 3
          %s204 = scalar_select %p203, %s202, 3
          %s205 = smul.addr %s204, 8
          %s206 = scalar_lea.vmem %s4, %s205
          %s207 = smul.u32 2, %s30
        $region28: #{tpu_custom_call.1} parent=15 // pred_fallthru
          _
      $region16: #{tpu_custom_call.1} parent=5 // pred_fallthru
        _
      %p208 = scmp.le.s32.totalorder 1, %s30
      %p209 = scmp.lt.s32.totalorder %s30, 3
      %p210 = pnand %p208, %p209
      %p211 = pneg %p210
      // Predicated region
      $region29: #{tpu_custom_call.1} parent=5 // pred_check
        _
      $region30: #{tpu_custom_call.1} parent=5 // pred_check_branch
        %213 = sbr.rel (%p210) target = $region32
      $region31: #{tpu_custom_call.1} parent=5 // pred_region
        %s214 = ssub.s32 %s30, 1
        %s215 = sand.u32 %s43, 1
        %s216 = scalar_lea.sflag [#allocation6], %s215
        %s217 = sand.u32 %s43, 1
        %s218 = smul.addr %s217, 64
        %s219 = scalar_lea.vmem [#allocation5], %s218
        // Predicated region
        $region33: #{tpu_custom_call.1} parent=31 // pred_check
          %p220 = pneg %p56
        $region34: #{tpu_custom_call.1} parent=31 // pred_check_branch
          %222 = sbr.rel (%p220) target = $region36
        $region35: #{tpu_custom_call.1} parent=31 // pred_region
          %224 = dma.done %s216, 1024
        $region36: #{tpu_custom_call.1} parent=31 // pred_fallthru
          _
        %s225 = sand.u32 %s69, 1
        %s226 = scalar_lea.sflag [#allocation8], %s225
        %s227 = sand.u32 %s69, 1
        %s228 = smul.addr %s227, 64
        %s229 = scalar_lea.vmem [#allocation7], %s228
        // Predicated region
        $region37: #{tpu_custom_call.1} parent=31 // pred_check
          %p230 = pneg %p82
        $region38: #{tpu_custom_call.1} parent=31 // pred_check_branch
          %232 = sbr.rel (%p230) target = $region40
        $region39: #{tpu_custom_call.1} parent=31 // pred_region
          %234 = dma.done %s226, 1024
        $region40: #{tpu_custom_call.1} parent=31 // pred_fallthru
          _
        %s235 = sand.u32 %s43, 1
        %s236 = scalar_lea.sflag [#allocation6], %s235
        %s237 = sand.u32 %s43, 1
        %s238 = smul.addr %s237, 64
        %s239 = scalar_lea.vmem [#allocation5], %s238
        %p240 = pneg %p56
        %p241 = pneg %p53
        %s242 = sand.u32 %s69, 1
        %s243 = scalar_lea.sflag [#allocation8], %s242
        %s244 = sand.u32 %s69, 1
        %s245 = smul.addr %s244, 64
        %s246 = scalar_lea.vmem [#allocation7], %s245
        %p247 = pneg %p82
        %p248 = pneg %p79
        %s249 = smul.u32 2, %s35
        %p250 = scmp.lt.s32.totalorder %s249, 3
        %s251 = scalar_select %p250, %s249, 3
        %s252 = smul.addr %s251, 8
        %s253 = scalar_lea.vmem %s4, %s252
        %p254 = pneg %p108
        %p255 = pneg %p105
        %p256 = pneg %p134
        %p257 = pneg %p131
        %s258 = smul.u32 2, %s35
        %p259 = scmp.lt.s32.totalorder %s258, 3
        %s260 = scalar_select %p259, %s258, 3
        %s261 = smul.addr %s260, 8
        %s262 = scalar_lea.vmem %s5, %s261
        %s263 = smul.u32 2, %s35
        %s264 = smul.u32 2, %s35
        %s265 = smul.u32 2, %s35
        %p266 = scmp.lt.s32.totalorder %s265, 3
        %s267 = scalar_select %p266, %s265, 3
        %s268 = smul.addr %s267, 8
        %s269 = scalar_lea.vmem %s4, %s268
        %s270 = smul.u32 2, %s35
        %s271 = smul.u32 2, %s35
        %p272 = scmp.lt.s32.totalorder %s271, 3
        %s273 = scalar_select %p272, %s271, 3
        %s274 = smul.addr %s273, 8
        %s275 = scalar_lea.vmem %s5, %s274
        %s276 = smul.u32 2, %s35
        %v277 = vld [vmem:[%s269] sm:$0xff]
        %v278 = vld [vmem:[%s269 + $0x8] sm:$0xff]
        %v279 = vmul.f32 %v277, %v277
        %v280 = vmul.f32 %v278, %v278
        %v281 = vadd.f32 %v279, 0.25
        %v282 = vadd.f32 %v280, 0.25
        %v283 = vrsqrt.pop %v281
        %v284 = vmul.f32 %v283, %v281
        %v285 = vmul.f32 %v284, %v283
        %v286 = vmul.f32 0.5, %v285
        %v287 = vsub.f32 1.5, %v286
        %v288 = vmul.f32 %v283, %v287
        %vm289 = vweird.f32 %v281
        %vm290 = vweird.f32 %v283
        %vm291 = vmor %vm289, %vm290
        %v292 = vsel %vm291, %v283, %v288
        %v293 = vrsqrt.pop %v282
        %v294 = vmul.f32 %v293, %v282
        %v295 = vmul.f32 %v294, %v293
        %v296 = vmul.f32 0.5, %v295
        %v297 = vsub.f32 1.5, %v296
        %v298 = vmul.f32 %v293, %v297
        %vm299 = vweird.f32 %v282
        %vm300 = vweird.f32 %v293
        %vm301 = vmor %vm299, %vm300
        %v302 = vsel %vm301, %v293, %v298
        %v303 = vrcp.pop %v281
        %v304 = vmul.f32 %v281, %v303
        %v305 = vsub.f32 1.0, %v304
        %v306 = vmul.f32 %v303, %v305
        %v307 = vadd.f32 %v303, %v306
        %vm308 = vweird.f32 %v281
        %vm309 = vweird.f32 %v303
        %vm310 = vmor %vm308, %vm309
        %v311 = vsel %vm310, %v303, %v307
        %v312 = vand.u32 2147483647, %v281
        %vm313 = vcmp.eq.f32.partialorder %v312, 8.507059e+37
        %v314 = vand.u32 %v281, 2147483648
        %v315 = vor.u32 1.1754944e-38, %v314
        %v316 = vsel %vm313, %v315, %v311
        %v317 = vmul.f32 0.25, %v316
        %v318 = vrcp.pop %v282
        %v319 = vmul.f32 %v282, %v318
        %v320 = vsub.f32 1.0, %v319
        %v321 = vmul.f32 %v318, %v320
        %v322 = vadd.f32 %v318, %v321
        %vm323 = vweird.f32 %v282
        %vm324 = vweird.f32 %v318
        %vm325 = vmor %vm323, %vm324
        %v326 = vsel %vm325, %v318, %v322
        %v327 = vand.u32 2147483647, %v282
        %vm328 = vcmp.eq.f32.partialorder %v327, 8.507059e+37
        %v329 = vand.u32 %v282, 2147483648
        %v330 = vor.u32 1.1754944e-38, %v329
        %v331 = vsel %vm328, %v330, %v326
        %v332 = vmul.f32 0.25, %v331
        %v333 = vmul.f32 %v277, 0.5
        %v334 = vmul.f32 %v278, 0.5
        %v335 = vmul.f32 %v333, %v292
        %v336 = vmul.f32 %v334, %v302
        %v337 = vmul.f32 %v279, 0.25
        %v338 = vmul.f32 %v280, 0.25
        %v339 = vrcp.pop %v337
        %v340 = vmul.f32 %v337, %v339
        %v341 = vsub.f32 1.0, %v340
        %v342 = vmul.f32 %v339, %v341
        %v343 = vadd.f32 %v339, %v342
        %vm344 = vweird.f32 %v337
        %vm345 = vweird.f32 %v339
        %vm346 = vmor %vm344, %vm345
        %v347 = vsel %vm346, %v339, %v343
        %v348 = vand.u32 2147483647, %v337
        %vm349 = vcmp.eq.f32.partialorder %v348, 8.507059e+37
        %v350 = vand.u32 %v337, 2147483648
        %v351 = vor.u32 1.1754944e-38, %v350
        %v352 = vsel %vm349, %v351, %v347
        %v353 = vmul.f32 %v281, %v352
        %v354 = vrcp.pop %v338
        %v355 = vmul.f32 %v338, %v354
        %v356 = vsub.f32 1.0, %v355
        %v357 = vmul.f32 %v354, %v356
        %v358 = vadd.f32 %v354, %v357
        %vm359 = vweird.f32 %v338
        %vm360 = vweird.f32 %v354
        %vm361 = vmor %vm359, %vm360
        %v362 = vsel %vm361, %v354, %v358
        %v363 = vand.u32 2147483647, %v338
        %vm364 = vcmp.eq.f32.partialorder %v363, 8.507059e+37
        %v365 = vand.u32 %v338, 2147483648
        %v366 = vor.u32 1.1754944e-38, %v365
        %v367 = vsel %vm364, %v366, %v362
        %v368 = vmul.f32 %v282, %v367
        %v369 = vmul.f32 %v353, 0.0009765625
        %v370 = vmul.f32 %v368, 0.0009765625
        %s371 = sld [smem:[#allocation3]]
        %v372 = vstv %s371
        %v373 = vmul.f32 %v292, %v372
        %v374 = vmul.f32 %v302, %v372
        %s375 = sld [smem:[#allocation3 + $0x1]]
        %v376 = vstv %s375
        %v377 = vmul.f32 %v292, %v376
        %v378 = vmul.f32 %v302, %v376
        %s379 = sld [smem:[#allocation3 + $0x2]]
        %v380 = vstv %s379
        %v381 = vmul.f32 %v292, %v380
        %v382 = vmul.f32 %v302, %v380
        %s383 = sld [smem:[#allocation3 + $0x3]]
        %v384 = vstv %s383
        %v385 = vmul.f32 %v292, %v384
        %v386 = vmul.f32 %v302, %v384
        %s387 = sld [smem:[#allocation3 + $0x4]]
        %v388 = vstv %s387
        %v389 = vmul.f32 %v292, %v388
        %v390 = vmul.f32 %v302, %v388
        %s391 = sld [smem:[#allocation3 + $0x5]]
        %v392 = vstv %s391
        %v393 = vmul.f32 %v292, %v392
        %v394 = vmul.f32 %v302, %v392
        %s395 = sld [smem:[#allocation3 + $0x6]]
        %v396 = vstv %s395
        %v397 = vmul.f32 %v292, %v396
        %v398 = vmul.f32 %v302, %v396
        %s399 = sld [smem:[#allocation3 + $0x7]]
        %v400 = vstv %s399
        %v401 = vmul.f32 %v292, %v400
        %v402 = vmul.f32 %v302, %v400
        %s403 = sld [smem:[#allocation3 + $0x8]]
        %v404 = vstv %s403
        %v405 = vmul.f32 %v292, %v404
        %v406 = vmul.f32 %v302, %v404
        %s407 = sld [smem:[#allocation3 + $0x9]]
        %v408 = vstv %s407
        %v409 = vmul.f32 %v292, %v408
        %v410 = vmul.f32 %v302, %v408
        %s411 = sld [smem:[#allocation3 + $0xa]]
        %v412 = vstv %s411
        %v413 = vmul.f32 %v292, %v412
        %v414 = vmul.f32 %v302, %v412
        %s415 = sld [smem:[#allocation3 + $0xb]]
        %v416 = vstv %s415
        %v417 = vmul.f32 %v292, %v416
        %v418 = vmul.f32 %v302, %v416
        %s419 = sld [smem:[#allocation3 + $0xc]]
        %v420 = vstv %s419
        %v421 = vmul.f32 %v292, %v420
        %v422 = vmul.f32 %v302, %v420
        %s423 = sld [smem:[#allocation3 + $0xd]]
        %v424 = vstv %s423
        %v425 = vmul.f32 %v292, %v424
        %v426 = vmul.f32 %v302, %v424
        %s427 = sld [smem:[#allocation3 + $0xe]]
        %v428 = vstv %s427
        %v429 = vmul.f32 %v292, %v428
        %v430 = vmul.f32 %v302, %v428
        %s431 = sld [smem:[#allocation3 + $0xf]]
        %v432 = vstv %s431
        %v433 = vmul.f32 %v292, %v432
        %v434 = vmul.f32 %v302, %v432
        %v435 = vld [vmem:[%s219] sm:$0xff]
        %v436 = vld [vmem:[%s219 + $0x20] sm:$0xff]
        %v437 = vunpack.c.l.bf16 %v435
        %v438 = vunpack.c.h.bf16 %v435
        %v439 = vunpack.c.l.bf16 %v436
        %v440 = vunpack.c.h.bf16 %v436
        %v441 = vld [vmem:[%s229] sm:$0xff]
        %v442 = vld [vmem:[%s229 + $0x20] sm:$0xff]
        %v443 = vunpack.c.l.bf16 %v441
        %v444 = vunpack.c.h.bf16 %v441
        %v445 = vunpack.c.l.bf16 %v442
        %v446 = vunpack.c.h.bf16 %v442
        %448 = vset.pattern.permute.xlu0 0
        %449 = vperm.xlu0 %448, %v277
        %v450 = vpop.permute.xlu0 %449
        %453 = vset.pattern.permute.xlu0 0
        %454 = vperm.xlu0 %453, %v278
        %v455 = vpop.permute.xlu0 %454
        %v457 = vmul.f32 %v443, %v450
        %v458 = vmul.f32 %v444, %v450
        %v459 = vmul.f32 %v445, %v455
        %v460 = vmul.f32 %v446, %v455
        %v461 = vadd.f32 %v437, %v457
        %v462 = vadd.f32 %v438, %v458
        %v463 = vadd.f32 %v439, %v459
        %v464 = vadd.f32 %v440, %v460
        %v465 = vld [vmem:[%s219 + $0x8] sm:$0xff]
        %v466 = vld [vmem:[%s219 + $0x28] sm:$0xff]
        %v467 = vunpack.c.l.bf16 %v465
        %v468 = vunpack.c.h.bf16 %v465
        %v469 = vunpack.c.l.bf16 %v466
        %v470 = vunpack.c.h.bf16 %v466
        %v471 = vld [vmem:[%s229 + $0x8] sm:$0xff]
        %v472 = vld [vmem:[%s229 + $0x28] sm:$0xff]
        %v473 = vunpack.c.l.bf16 %v471
        %v474 = vunpack.c.h.bf16 %v471
        %v475 = vunpack.c.l.bf16 %v472
        %v476 = vunpack.c.h.bf16 %v472
        %v477 = vmul.f32 %v473, %v450
        %v478 = vmul.f32 %v474, %v450
        %v479 = vmul.f32 %v475, %v455
        %v480 = vmul.f32 %v476, %v455
        %v481 = vadd.f32 %v467, %v477
        %v482 = vadd.f32 %v468, %v478
        %v483 = vadd.f32 %v469, %v479
        %v484 = vadd.f32 %v470, %v480
        %v485 = vld [vmem:[%s219 + $0x10] sm:$0xff]
        %v486 = vld [vmem:[%s219 + $0x30] sm:$0xff]
        %v487 = vunpack.c.l.bf16 %v485
        %v488 = vunpack.c.h.bf16 %v485
        %v489 = vunpack.c.l.bf16 %v486
        %v490 = vunpack.c.h.bf16 %v486
        %v491 = vld [vmem:[%s229 + $0x10] sm:$0xff]
        %v492 = vld [vmem:[%s229 + $0x30] sm:$0xff]
        %v493 = vunpack.c.l.bf16 %v491
        %v494 = vunpack.c.h.bf16 %v491
        %v495 = vunpack.c.l.bf16 %v492
        %v496 = vunpack.c.h.bf16 %v492
        %v497 = vmul.f32 %v493, %v450
        %v498 = vmul.f32 %v494, %v450
        %v499 = vmul.f32 %v495, %v455
        %v500 = vmul.f32 %v496, %v455
        %v501 = vadd.f32 %v487, %v497
        %v502 = vadd.f32 %v488, %v498
        %v503 = vadd.f32 %v489, %v499
        %v504 = vadd.f32 %v490, %v500
        %v505 = vld [vmem:[%s219 + $0x18] sm:$0xff]
        %v506 = vld [vmem:[%s219 + $0x38] sm:$0xff]
        %v507 = vunpack.c.l.bf16 %v505
        %v508 = vunpack.c.h.bf16 %v505
        %v509 = vunpack.c.l.bf16 %v506
        %v510 = vunpack.c.h.bf16 %v506
        %v511 = vld [vmem:[%s229 + $0x18] sm:$0xff]
        %v512 = vld [vmem:[%s229 + $0x38] sm:$0xff]
        %v513 = vunpack.c.l.bf16 %v511
        %v514 = vunpack.c.h.bf16 %v511
        %v515 = vunpack.c.l.bf16 %v512
        %v516 = vunpack.c.h.bf16 %v512
        %v517 = vmul.f32 %v513, %v450
        %v518 = vmul.f32 %v514, %v450
        %v519 = vmul.f32 %v515, %v455
        %v520 = vmul.f32 %v516, %v455
        %v521 = vadd.f32 %v507, %v517
        %v522 = vadd.f32 %v508, %v518
        %v523 = vadd.f32 %v509, %v519
        %v524 = vadd.f32 %v510, %v520
        %526 = vset.pattern.permute.xlu0 0
        %527 = vperm.xlu0 %526, %v373
        %v528 = vpop.permute.xlu0 %527
        %531 = vset.pattern.permute.xlu0 0
        %532 = vperm.xlu0 %531, %v374
        %v533 = vpop.permute.xlu0 %532
        %v535 = vmul.f32 %v461, %v528
        %v536 = vmul.f32 %v462, %v528
        %v537 = vmul.f32 %v463, %v533
        %v538 = vmul.f32 %v464, %v533
        %540 = vset.pattern.permute.xlu0 0
        %541 = vperm.xlu0 %540, %v389
        %v542 = vpop.permute.xlu0 %541
        %545 = vset.pattern.permute.xlu0 0
        %546 = vperm.xlu0 %545, %v390
        %v547 = vpop.permute.xlu0 %546
        %v549 = vmul.f32 %v481, %v542
        %v550 = vmul.f32 %v482, %v542
        %v551 = vmul.f32 %v483, %v547
        %v552 = vmul.f32 %v484, %v547
        %v553 = vadd.f32 %v535, %v549
        %v554 = vadd.f32 %v536, %v550
        %v555 = vadd.f32 %v537, %v551
        %v556 = vadd.f32 %v538, %v552
        %558 = vset.pattern.permute.xlu0 0
        %559 = vperm.xlu0 %558, %v405
        %v560 = vpop.permute.xlu0 %559
        %563 = vset.pattern.permute.xlu0 0
        %564 = vperm.xlu0 %563, %v406
        %v565 = vpop.permute.xlu0 %564
        %v567 = vmul.f32 %v501, %v560
        %v568 = vmul.f32 %v502, %v560
        %v569 = vmul.f32 %v503, %v565
        %v570 = vmul.f32 %v504, %v565
        %v571 = vadd.f32 %v553, %v567
        %v572 = vadd.f32 %v554, %v568
        %v573 = vadd.f32 %v555, %v569
        %v574 = vadd.f32 %v556, %v570
        %576 = vset.pattern.permute.xlu0 0
        %577 = vperm.xlu0 %576, %v421
        %v578 = vpop.permute.xlu0 %577
        %581 = vset.pattern.permute.xlu0 0
        %582 = vperm.xlu0 %581, %v422
        %v583 = vpop.permute.xlu0 %582
        %v585 = vmul.f32 %v521, %v578
        %v586 = vmul.f32 %v522, %v578
        %v587 = vmul.f32 %v523, %v583
        %v588 = vmul.f32 %v524, %v583
        %v589 = vadd.f32 %v571, %v585
        %v590 = vadd.f32 %v572, %v586
        %v591 = vadd.f32 %v573, %v587
        %v592 = vadd.f32 %v574, %v588
        %s593 = sld [smem:[#allocation4]]
        %v594 = vstv %s593
        %v595 = vadd.f32 %v589, %v594
        %v596 = vadd.f32 %v590, %v594
        %v597 = vadd.f32 %v591, %v594
        %v598 = vadd.f32 %v592, %v594
        %v599 = vtanh.pop %v595
        %v600 = vtanh.pop %v596
        %v601 = vtanh.pop %v597
        %v602 = vtanh.pop %v598
        %604 = vset.pattern.permute.xlu0 0
        %605 = vperm.xlu0 %604, %v335
        %v606 = vpop.permute.xlu0 %605
        %609 = vset.pattern.permute.xlu0 0
        %610 = vperm.xlu0 %609, %v336
        %v611 = vpop.permute.xlu0 %610
        %v613 = vmul.f32 %v599, %v606
        %v614 = vmul.f32 %v600, %v606
        %v615 = vmul.f32 %v601, %v611
        %v616 = vmul.f32 %v602, %v611
        %618 = vset.pattern.permute.xlu0 0
        %619 = vperm.xlu0 %618, %v317
        %v620 = vpop.permute.xlu0 %619
        %623 = vset.pattern.permute.xlu0 0
        %624 = vperm.xlu0 %623, %v332
        %v625 = vpop.permute.xlu0 %624
        %v627 = vmul.f32 %v461, %v620
        %v628 = vmul.f32 %v462, %v620
        %v629 = vmul.f32 %v463, %v625
        %v630 = vmul.f32 %v464, %v625
        %v631 = vadd.f32 %v613, %v627
        %v632 = vadd.f32 %v614, %v628
        %v633 = vadd.f32 %v615, %v629
        %v634 = vadd.f32 %v616, %v630
        %v635 = vsub.f32 %v631, %v437
        %v636 = vsub.f32 %v632, %v438
        %v637 = vsub.f32 %v633, %v439
        %v638 = vsub.f32 %v634, %v440
        %v639 = vmul.f32 %v635, %v635
        %v640 = vmul.f32 %v636, %v636
        %v641 = vmul.f32 %v637, %v637
        %v642 = vmul.f32 %v638, %v638
        %644 = vset.pattern.permute.xlu0 0
        %645 = vperm.xlu0 %644, %v377
        %v646 = vpop.permute.xlu0 %645
        %649 = vset.pattern.permute.xlu0 0
        %650 = vperm.xlu0 %649, %v378
        %v651 = vpop.permute.xlu0 %650
        %v653 = vmul.f32 %v461, %v646
        %v654 = vmul.f32 %v462, %v646
        %v655 = vmul.f32 %v463, %v651
        %v656 = vmul.f32 %v464, %v651
        %658 = vset.pattern.permute.xlu0 0
        %659 = vperm.xlu0 %658, %v393
        %v660 = vpop.permute.xlu0 %659
        %663 = vset.pattern.permute.xlu0 0
        %664 = vperm.xlu0 %663, %v394
        %v665 = vpop.permute.xlu0 %664
        %v667 = vmul.f32 %v481, %v660
        %v668 = vmul.f32 %v482, %v660
        %v669 = vmul.f32 %v483, %v665
        %v670 = vmul.f32 %v484, %v665
        %v671 = vadd.f32 %v653, %v667
        %v672 = vadd.f32 %v654, %v668
        %v673 = vadd.f32 %v655, %v669
        %v674 = vadd.f32 %v656, %v670
        %676 = vset.pattern.permute.xlu0 0
        %677 = vperm.xlu0 %676, %v409
        %v678 = vpop.permute.xlu0 %677
        %681 = vset.pattern.permute.xlu0 0
        %682 = vperm.xlu0 %681, %v410
        %v683 = vpop.permute.xlu0 %682
        %v685 = vmul.f32 %v501, %v678
        %v686 = vmul.f32 %v502, %v678
        %v687 = vmul.f32 %v503, %v683
        %v688 = vmul.f32 %v504, %v683
        %v689 = vadd.f32 %v671, %v685
        %v690 = vadd.f32 %v672, %v686
        %v691 = vadd.f32 %v673, %v687
        %v692 = vadd.f32 %v674, %v688
        %694 = vset.pattern.permute.xlu0 0
        %695 = vperm.xlu0 %694, %v425
        %v696 = vpop.permute.xlu0 %695
        %699 = vset.pattern.permute.xlu0 0
        %700 = vperm.xlu0 %699, %v426
        %v701 = vpop.permute.xlu0 %700
        %v703 = vmul.f32 %v521, %v696
        %v704 = vmul.f32 %v522, %v696
        %v705 = vmul.f32 %v523, %v701
        %v706 = vmul.f32 %v524, %v701
        %v707 = vadd.f32 %v689, %v703
        %v708 = vadd.f32 %v690, %v704
        %v709 = vadd.f32 %v691, %v705
        %v710 = vadd.f32 %v692, %v706
        %s711 = sld [smem:[#allocation4 + $0x1]]
        %v712 = vstv %s711
        %v713 = vadd.f32 %v707, %v712
        %v714 = vadd.f32 %v708, %v712
        %v715 = vadd.f32 %v709, %v712
        %v716 = vadd.f32 %v710, %v712
        %v717 = vtanh.pop %v713
        %v718 = vtanh.pop %v714
        %v719 = vtanh.pop %v715
        %v720 = vtanh.pop %v716
        %v721 = vmul.f32 %v717, %v606
        %v722 = vmul.f32 %v718, %v606
        %v723 = vmul.f32 %v719, %v611
        %v724 = vmul.f32 %v720, %v611
        %v725 = vmul.f32 %v481, %v620
        %v726 = vmul.f32 %v482, %v620
        %v727 = vmul.f32 %v483, %v625
        %v728 = vmul.f32 %v484, %v625
        %v729 = vadd.f32 %v721, %v725
        %v730 = vadd.f32 %v722, %v726
        %v731 = vadd.f32 %v723, %v727
        %v732 = vadd.f32 %v724, %v728
        %v733 = vsub.f32 %v729, %v467
        %v734 = vsub.f32 %v730, %v468
        %v735 = vsub.f32 %v731, %v469
        %v736 = vsub.f32 %v732, %v470
        %v737 = vmul.f32 %v733, %v733
        %v738 = vmul.f32 %v734, %v734
        %v739 = vmul.f32 %v735, %v735
        %v740 = vmul.f32 %v736, %v736
        %v741 = vadd.f32 %v639, %v737
        %v742 = vadd.f32 %v640, %v738
        %v743 = vadd.f32 %v641, %v739
        %v744 = vadd.f32 %v642, %v740
        %746 = vset.pattern.permute.xlu0 0
        %747 = vperm.xlu0 %746, %v381
        %v748 = vpop.permute.xlu0 %747
        %751 = vset.pattern.permute.xlu0 0
        %752 = vperm.xlu0 %751, %v382
        %v753 = vpop.permute.xlu0 %752
        %v755 = vmul.f32 %v461, %v748
        %v756 = vmul.f32 %v462, %v748
        %v757 = vmul.f32 %v463, %v753
        %v758 = vmul.f32 %v464, %v753
        %760 = vset.pattern.permute.xlu0 0
        %761 = vperm.xlu0 %760, %v397
        %v762 = vpop.permute.xlu0 %761
        %765 = vset.pattern.permute.xlu0 0
        %766 = vperm.xlu0 %765, %v398
        %v767 = vpop.permute.xlu0 %766
        %v769 = vmul.f32 %v481, %v762
        %v770 = vmul.f32 %v482, %v762
        %v771 = vmul.f32 %v483, %v767
        %v772 = vmul.f32 %v484, %v767
        %v773 = vadd.f32 %v755, %v769
        %v774 = vadd.f32 %v756, %v770
        %v775 = vadd.f32 %v757, %v771
        %v776 = vadd.f32 %v758, %v772
        %778 = vset.pattern.permute.xlu0 0
        %779 = vperm.xlu0 %778, %v413
        %v780 = vpop.permute.xlu0 %779
        %783 = vset.pattern.permute.xlu0 0
        %784 = vperm.xlu0 %783, %v414
        %v785 = vpop.permute.xlu0 %784
        %v787 = vmul.f32 %v501, %v780
        %v788 = vmul.f32 %v502, %v780
        %v789 = vmul.f32 %v503, %v785
        %v790 = vmul.f32 %v504, %v785
        %v791 = vadd.f32 %v773, %v787
        %v792 = vadd.f32 %v774, %v788
        %v793 = vadd.f32 %v775, %v789
        %v794 = vadd.f32 %v776, %v790
        %796 = vset.pattern.permute.xlu0 0
        %797 = vperm.xlu0 %796, %v429
        %v798 = vpop.permute.xlu0 %797
        %801 = vset.pattern.permute.xlu0 0
        %802 = vperm.xlu0 %801, %v430
        %v803 = vpop.permute.xlu0 %802
        %v805 = vmul.f32 %v521, %v798
        %v806 = vmul.f32 %v522, %v798
        %v807 = vmul.f32 %v523, %v803
        %v808 = vmul.f32 %v524, %v803
        %v809 = vadd.f32 %v791, %v805
        %v810 = vadd.f32 %v792, %v806
        %v811 = vadd.f32 %v793, %v807
        %v812 = vadd.f32 %v794, %v808
        %s813 = sld [smem:[#allocation4 + $0x2]]
        %v814 = vstv %s813
        %v815 = vadd.f32 %v809, %v814
        %v816 = vadd.f32 %v810, %v814
        %v817 = vadd.f32 %v811, %v814
        %v818 = vadd.f32 %v812, %v814
        %v819 = vtanh.pop %v815
        %v820 = vtanh.pop %v816
        %v821 = vtanh.pop %v817
        %v822 = vtanh.pop %v818
        %v823 = vmul.f32 %v819, %v606
        %v824 = vmul.f32 %v820, %v606
        %v825 = vmul.f32 %v821, %v611
        %v826 = vmul.f32 %v822, %v611
        %v827 = vmul.f32 %v501, %v620
        %v828 = vmul.f32 %v502, %v620
        %v829 = vmul.f32 %v503, %v625
        %v830 = vmul.f32 %v504, %v625
        %v831 = vadd.f32 %v823, %v827
        %v832 = vadd.f32 %v824, %v828
        %v833 = vadd.f32 %v825, %v829
        %v834 = vadd.f32 %v826, %v830
        %v835 = vsub.f32 %v831, %v487
        %v836 = vsub.f32 %v832, %v488
        %v837 = vsub.f32 %v833, %v489
        %v838 = vsub.f32 %v834, %v490
        %v839 = vmul.f32 %v835, %v835
        %v840 = vmul.f32 %v836, %v836
        %v841 = vmul.f32 %v837, %v837
        %v842 = vmul.f32 %v838, %v838
        %v843 = vadd.f32 %v741, %v839
        %v844 = vadd.f32 %v742, %v840
        %v845 = vadd.f32 %v743, %v841
        %v846 = vadd.f32 %v744, %v842
        %848 = vset.pattern.permute.xlu0 0
        %849 = vperm.xlu0 %848, %v385
        %v850 = vpop.permute.xlu0 %849
        %853 = vset.pattern.permute.xlu0 0
        %854 = vperm.xlu0 %853, %v386
        %v855 = vpop.permute.xlu0 %854
        %v857 = vmul.f32 %v461, %v850
        %v858 = vmul.f32 %v462, %v850
        %v859 = vmul.f32 %v463, %v855
        %v860 = vmul.f32 %v464, %v855
        %862 = vset.pattern.permute.xlu0 0
        %863 = vperm.xlu0 %862, %v401
        %v864 = vpop.permute.xlu0 %863
        %867 = vset.pattern.permute.xlu0 0
        %868 = vperm.xlu0 %867, %v402
        %v869 = vpop.permute.xlu0 %868
        %v871 = vmul.f32 %v481, %v864
        %v872 = vmul.f32 %v482, %v864
        %v873 = vmul.f32 %v483, %v869
        %v874 = vmul.f32 %v484, %v869
        %v875 = vadd.f32 %v857, %v871
        %v876 = vadd.f32 %v858, %v872
        %v877 = vadd.f32 %v859, %v873
        %v878 = vadd.f32 %v860, %v874
        %880 = vset.pattern.permute.xlu0 0
        %881 = vperm.xlu0 %880, %v417
        %v882 = vpop.permute.xlu0 %881
        %885 = vset.pattern.permute.xlu0 0
        %886 = vperm.xlu0 %885, %v418
        %v887 = vpop.permute.xlu0 %886
        %v889 = vmul.f32 %v501, %v882
        %v890 = vmul.f32 %v502, %v882
        %v891 = vmul.f32 %v503, %v887
        %v892 = vmul.f32 %v504, %v887
        %v893 = vadd.f32 %v875, %v889
        %v894 = vadd.f32 %v876, %v890
        %v895 = vadd.f32 %v877, %v891
        %v896 = vadd.f32 %v878, %v892
        %898 = vset.pattern.permute.xlu0 0
        %899 = vperm.xlu0 %898, %v433
        %v900 = vpop.permute.xlu0 %899
        %903 = vset.pattern.permute.xlu0 0
        %904 = vperm.xlu0 %903, %v434
        %v905 = vpop.permute.xlu0 %904
        %v907 = vmul.f32 %v521, %v900
        %v908 = vmul.f32 %v522, %v900
        %v909 = vmul.f32 %v523, %v905
        %v910 = vmul.f32 %v524, %v905
        %v911 = vadd.f32 %v893, %v907
        %v912 = vadd.f32 %v894, %v908
        %v913 = vadd.f32 %v895, %v909
        %v914 = vadd.f32 %v896, %v910
        %s915 = sld [smem:[#allocation4 + $0x3]]
        %v916 = vstv %s915
        %v917 = vadd.f32 %v911, %v916
        %v918 = vadd.f32 %v912, %v916
        %v919 = vadd.f32 %v913, %v916
        %v920 = vadd.f32 %v914, %v916
        %v921 = vtanh.pop %v917
        %v922 = vtanh.pop %v918
        %v923 = vtanh.pop %v919
        %v924 = vtanh.pop %v920
        %v925 = vmul.f32 %v921, %v606
        %v926 = vmul.f32 %v922, %v606
        %v927 = vmul.f32 %v923, %v611
        %v928 = vmul.f32 %v924, %v611
        %v929 = vmul.f32 %v521, %v620
        %v930 = vmul.f32 %v522, %v620
        %v931 = vmul.f32 %v523, %v625
        %v932 = vmul.f32 %v524, %v625
        %v933 = vadd.f32 %v925, %v929
        %v934 = vadd.f32 %v926, %v930
        %v935 = vadd.f32 %v927, %v931
        %v936 = vadd.f32 %v928, %v932
        %v937 = vsub.f32 %v933, %v507
        %v938 = vsub.f32 %v934, %v508
        %v939 = vsub.f32 %v935, %v509
        %v940 = vsub.f32 %v936, %v510
        %v941 = vmul.f32 %v937, %v937
        %v942 = vmul.f32 %v938, %v938
        %v943 = vmul.f32 %v939, %v939
        %v944 = vmul.f32 %v940, %v940
        %v945 = vadd.f32 %v843, %v941
        %v946 = vadd.f32 %v844, %v942
        %v947 = vadd.f32 %v845, %v943
        %v948 = vadd.f32 %v846, %v944
        %v949 = vadd.f32 %v945, %v946
        %950 = vadd.xlane.f32.xlu0 %v949
        %v951 = vpop.xlane.xlu0 %950
        %v952 = vadd.f32 %v947, %v948
        %953 = vadd.xlane.f32.xlu0 %v952
        %v954 = vpop.xlane.xlu0 %953
        %v955 = vmul.f32 %v951, %v369
        %v956 = vmul.f32 %v954, %v370
        %vm957 = vcmask 7168
        %958 = vst.msk [vmem:[%s275] sm:$0xff] %vm957, %v955
        %959 = vst.msk [vmem:[%s275 + $0x8] sm:$0xff] %vm957, %v956
        %s960 = smul.u32 2, %s35
        %p961 = scmp.lt.s32.totalorder %s960, 3
        %s962 = scalar_select %p961, %s960, 3
        %s963 = smul.addr %s962, 8
        %s964 = scalar_lea.vmem %s5, %s963
        // Predicated region
        $region41: #{tpu_custom_call.1} parent=31 // pred_check
          %p965 = pneg %p131
        $region42: #{tpu_custom_call.1} parent=31 // pred_check_branch
          %967 = sbr.rel (%p965) target = $region44
        $region43: #{tpu_custom_call.1} parent=31 // pred_region
          %s968 = smul.u32 2, %s35
        $region44: #{tpu_custom_call.1} parent=31 // pred_fallthru
          _
      $region32: #{tpu_custom_call.1} parent=5 // pred_fallthru
        _
      %p969 = scmp.le.s32.totalorder 2, %s30
      // Predicated region
      $region45: #{tpu_custom_call.1} parent=5 // pred_check
        %p970 = pneg %p969
      $region46: #{tpu_custom_call.1} parent=5 // pred_check_branch
        %972 = sbr.rel (%p970) target = $region48
      $region47: #{tpu_custom_call.1} parent=5 // pred_region
        %s973 = ssub.s32 %s30, 2
        // Predicated region
        $region49: #{tpu_custom_call.1} parent=47 // pred_check
          %p974 = pneg %p137
        $region50: #{tpu_custom_call.1} parent=47 // pred_check_branch
          %976 = sbr.rel (%p974) target = $region52
        $region51: #{tpu_custom_call.1} parent=47 // pred_region
          %s977 = smul.u32 2, %s36
          %p978 = scmp.lt.s32.totalorder %s977, 3
          %s979 = scalar_select %p978, %s977, 3
          %s980 = smul.addr %s979, 8
          %s981 = scalar_lea.vmem %s5, %s980
        $region52: #{tpu_custom_call.1} parent=47 // pred_fallthru
          _
      $region48: #{tpu_custom_call.1} parent=5 // pred_fallthru
        _
    $region6: #{tpu_custom_call.1} parent=1 // loop_footer
      %s34 = sadd.s32 1, %s30
    $region7: #{tpu_custom_call.1} parent=1 // loop_footer_branch
      %29 = sbr.rel target = $region3
    $region8: #{tpu_custom_call.1} parent=1 // loop_exit
      _
    %982 = vsyncpa [#allocation6], 1
    %s983 = scalar_lea.sflag [#allocation6], 1
    %984 = vsyncpa %s983, 1
    %985 = vsyncpa [#allocation8], 1
    %s986 = scalar_lea.sflag [#allocation8], 1
    %987 = vsyncpa %s986, 1

</llo_original>
